<compile_context>
chip_gen: v6e
topology: v6e:2x2x1
jax: 0.10.0
libtpu: 0.0.40
codegen_flags: <defaults>
</compile_context>

<pallas_src>
import jax
import jax.numpy as jnp
from jax.experimental import pallas as pl
from jax.experimental.pallas import tpu as pltpu

_EPS = 1e-6                                # same eps as F.pairwise_distance
_VMEM_LIMIT_BYTES = 32 * 1024 * 1024       # valid on v5e/v6e (128 MiB) and v7x (64 MiB)
_WINDOW_BUDGET_BYTES = 3 * 1024 * 1024     # per f32-equivalent input window
_RESIDENT_LABEL_MAX_BYTES = 4 * 1024 * 1024


def _num_tensorcores_per_chip():
    """2 TensorCores only on v7x; v5e/v6e have 1 (extra 'parallel' steps are waste)."""
    try:
        kind = jax.devices()[0].device_kind.lower()
    except Exception:
        return 1
    return 2 if "v7" in kind else 1


def _make_kernel(margin, acc_threshold, B, TB, NT, T_per_core, label_resident):
    margin = float(margin)
    acc_threshold = float(acc_threshold)

    def kernel(x1_ref, x2_ref, label_ref, loss_ref, acc_ref, loss_acc, match_acc):
        c = pl.program_id(0)                     # partial index ("parallel", v7x only)
        t = pl.program_id(1)                     # row-tile index ("arbitrary")

        raw_idx = c * T_per_core + t             # unclamped tile id (for masking)
        tile_idx = jnp.minimum(raw_idx, NT - 1)  # clamped tile id (matches index_map)
        row_start = pl.multiple_of(tile_idx * TB, 8)

        # Global row ids from the UNCLAMPED tile id: padded tail rows and
        # duplicate (clamped) tiles land >= B and contribute exactly zero.
        rows = jax.lax.broadcasted_iota(jnp.int32, (TB, 1), 0) + raw_idx * TB
        valid = rows < B

        # Stream native dtype from HBM, upcast on the VPU (kernel is HBM-bound).
        x1 = x1_ref[...].astype(jnp.float32)
        x2 = x2_ref[...].astype(jnp.float32)
        diff = x1 - x2 + _EPS                                   # (TB, D)
        sq_dist = jnp.sum(diff * diff, axis=-1, keepdims=True)  # (TB, 1)
        d = jnp.sqrt(sq_dist)

        if label_resident and NT > 1:
            # Whole label vector is resident in VMEM; slice this tile's rows.
            y = label_ref[pl.ds(row_start, TB), :].astype(jnp.float32)
        else:
            y = label_ref[...].astype(jnp.float32)              # (TB, 1)

        hinge = jnp.maximum(margin - d, 0.0)
        per_row = (1.0 - y) * sq_dist + y * (hinge * hinge)
        match = ((d < acc_threshold) == (y == 0.0)).astype(jnp.float32)

        # jnp.where (not multiply) so garbage padded rows (possible Inf/NaN
        # intermediates) are dropped exactly.
        per_row = jnp.where(valid, per_row, 0.0)
        match = jnp.where(valid, match, 0.0)

        # Accumulate per-row partials in VMEM; reduce + SMEM scalar store only
        # once per partial (removes the per-step XLU reduce -> SMEM RMW tail).
        @pl.when(t == 0)
        def _():
            loss_acc[...] = jnp.zeros_like(loss_acc)
            match_acc[...] = jnp.zeros_like(match_acc)

        loss_acc[...] += per_row
        match_acc[...] += match

        @pl.when(t == T_per_core - 1)
        def _():
            loss_ref[0, 0] = jnp.sum(loss_acc[...])
            acc_ref[0, 0] = jnp.sum(match_acc[...])

    return kernel


def contrastive_loss(output1, output2, label, margin=1.0, acc_threshold=0.5,
                     block_rows=None):
    """Returns (loss, acc) scalars, matching the PyTorch module's OrderedDict."""
    B, D = output1.shape
    assert output2.shape == (B, D)
    assert label.shape == (B, 1)

    # --- row-tile size: sized by bytes per input window so DMAs are >= ~1-3 MiB
    # (HBM roofline plateau) while 2 inputs x 2 pipeline buffers + f32 upcast
    # temporaries stay comfortably inside v7x's 64 MiB VMEM.
    itemsize = max(jnp.dtype(output1.dtype).itemsize,
                   jnp.dtype(output2.dtype).itemsize)
    elem_bytes = max(itemsize, 4)              # bound the f32 temporaries too
    if block_rows is None:
        tb = _WINDOW_BUDGET_BYTES // (D * elem_bytes)
        tb = max(8, (tb // 8) * 8)
    else:
        tb = int(block_rows)

    if tb >= B:
        TB = B                                 # full-extent block (no /8 requirement)
    else:
        TB = max(8, (tb // 8) * 8)             # sublane constraint when tiling

    NT = -(-B // TB)                           # number of row tiles

    # Leading "parallel" axis: only as many partials as there are TensorCores
    # AND tiles of work; on v5e/v6e this collapses to 1 (no serial overhead).
    C = max(1, min(_num_tensorcores_per_chip(), NT))
    T_per_core = -(-NT // C)

    # Label handling: keep the (tiny) label vector resident in VMEM and slice it
    # per tile instead of DMA-ing 4*TB bytes every grid step.
    label_itemsize = jnp.dtype(label.dtype).itemsize
    padded_rows = NT * TB
    label_resident = padded_rows * label_itemsize <= _RESIDENT_LABEL_MAX_BYTES

    kernel = _make_kernel(margin, acc_threshold, B, TB, NT, T_per_core,
                          label_resident)

    def row_map(c, t):
        # Clamp so fully-out-of-range duplicate tiles re-read the last valid
        # block (their contribution is masked to zero inside the kernel).
        return (jnp.minimum(c * T_per_core + t, NT - 1), 0)

    if label_resident:
        if padded_rows != B:
            # Pad so the in-kernel dynamic slice never reads out of bounds.
            label_arg = jnp.pad(label, ((0, padded_rows - B), (0, 0)))
        else:
            label_arg = label
        label_spec = pl.BlockSpec((padded_rows, 1), lambda c, t: (0, 0))
    else:
        label_arg = label
        label_spec = pl.BlockSpec((TB, 1), row_map)

    loss_part, acc_part = pl.pallas_call(
        kernel,
        out_shape=(
            jax.ShapeDtypeStruct((C, 1), jnp.float32),   # per-partial loss sums
            jax.ShapeDtypeStruct((C, 1), jnp.float32),   # per-partial match counts
        ),
        grid_spec=pltpu.PrefetchScalarGridSpec(
            num_scalar_prefetch=0,
            grid=(C, T_per_core),
            in_specs=[
                pl.BlockSpec((TB, D), row_map),
                pl.BlockSpec((TB, D), row_map),
                label_spec,
            ],
            out_specs=(
                pl.BlockSpec((1, 1), lambda c, t: (c, 0),
                             memory_space=pltpu.MemorySpace.SMEM),
                pl.BlockSpec((1, 1), lambda c, t: (c, 0),
                             memory_space=pltpu.MemorySpace.SMEM),
            ),
            scratch_shapes=[
                pltpu.VMEM((TB, 1), jnp.float32),    # per-row loss accumulator
                pltpu.VMEM((TB, 1), jnp.float32),    # per-row match accumulator
            ],
        ),
        compiler_params=pltpu.CompilerParams(
            dimension_semantics=("parallel", "arbitrary"),
            vmem_limit_bytes=_VMEM_LIMIT_BYTES,
        ),
    )(output1, output2, label_arg)

    inv_b = 1.0 / B
    loss = jnp.sum(loss_part) * inv_b
    acc = jnp.sum(acc_part) * inv_b
    return loss, acc


def _reference(output1, output2, label, margin=1.0, acc_threshold=0.5):
    x1 = output1.astype(jnp.float32)
    x2 = output2.astype(jnp.float32)
    y = label.astype(jnp.float32)
    d = jnp.sqrt(jnp.sum((x1 - x2 + _EPS) ** 2, axis=-1, keepdims=True))
    loss = jnp.mean((1.0 - y) * d ** 2 + y * jnp.maximum(margin - d, 0.0) ** 2)
    pred = (d < acc_threshold).ravel()
    lbl = (y == 0.0).ravel()
    acc = jnp.mean((pred == lbl).astype(jnp.float32))
    return loss, acc


if __name__ == "__main__":
    # Case 1: small shape, single full-extent tile (mirrors the module's usage).
    k1, k2, k3 = jax.random.split(jax.random.PRNGKey(0), 3)
    B, D = 8, 32
    x1 = jax.random.normal(k1, (B, D), dtype=jnp.float32)
    x2 = jax.random.normal(k2, (B, D), dtype=jnp.float32)
    y = jax.random.bernoulli(k3, 0.5, (B, 1)).astype(jnp.float32)

    loss, acc = contrastive_loss(x1, x2, y)
    jax.block_until_ready((loss, acc))
    ref_loss, ref_acc = _reference(x1, x2, y)
    assert jnp.allclose(loss, ref_loss, rtol=1e-5, atol=1e-5), (loss, ref_loss)
    assert jnp.allclose(acc, ref_acc), (acc, ref_acc)

    # Case 2: exercises the tiled path — several row tiles, a ragged masked tail,
    # a padded resident label, and the VMEM accumulator finalize path.
    k4, k5, k6 = jax.random.split(jax.random.PRNGKey(1), 3)
    B2, D2 = 20, 128
    x1b = jax.random.normal(k4, (B2, D2), dtype=jnp.float32)
    x2b = jax.random.normal(k5, (B2, D2), dtype=jnp.float32)
    yb = jax.random.bernoulli(k6, 0.5, (B2, 1)).astype(jnp.float32)

    loss2, acc2 = contrastive_loss(x1b, x2b, yb, block_rows=8)
    jax.block_until_ready((loss2, acc2))
    ref_loss2, ref_acc2 = _reference(x1b, x2b, yb)
    assert jnp.allclose(loss2, ref_loss2, rtol=1e-5, atol=1e-5), (loss2, ref_loss2)
    assert jnp.allclose(acc2, ref_acc2), (acc2, ref_acc2)

    # Case 3: bf16 inputs (native-dtype streaming + in-kernel upcast), ragged tail.
    k7, k8, k9 = jax.random.split(jax.random.PRNGKey(2), 3)
    B3, D3 = 22, 256
    x1c = jax.random.normal(k7, (B3, D3), dtype=jnp.bfloat16)
    x2c = jax.random.normal(k8, (B3, D3), dtype=jnp.bfloat16)
    yc = jax.random.bernoulli(k9, 0.5, (B3, 1)).astype(jnp.float32)

    loss3, acc3 = contrastive_loss(x1c, x2c, yc, block_rows=16)
    jax.block_until_ready((loss3, acc3))
    ref_loss3, ref_acc3 = _reference(x1c, x2c, yc)
    assert jnp.allclose(loss3, ref_loss3, rtol=1e-4, atol=1e-4), (loss3, ref_loss3)
    assert jnp.allclose(acc3, ref_acc3), (acc3, ref_acc3)

    print("KERNEL_OK")
</pallas_src>

<mosaic_0001>
module attributes {stable_mosaic.version = 11 : i64} {
  func.func @kernel(%arg0: i32, %arg1: i32, %arg2: memref<8x32xf32, #tpu.memory_space<vmem>>, %arg3: memref<8x32xf32, #tpu.memory_space<vmem>>, %arg4: memref<8x1xf32, #tpu.memory_space<vmem>>, %arg5: memref<1x1xf32, #tpu.memory_space<smem>>, %arg6: memref<1x1xf32, #tpu.memory_space<smem>>, %arg7: memref<8x1xf32, #tpu.memory_space<vmem>>, %arg8: memref<8x1xf32, #tpu.memory_space<vmem>>) attributes {dimension_semantics = [#tpu.dimension_semantics<parallel>, #tpu.dimension_semantics<arbitrary>], iteration_bounds = array<i64: 1, 1>, scalar_prefetch = 0 : i64, scratch_operands = 2 : i64, tpu.core_type = #tpu.core_type<tc>, window_params = [{transform_indices = @transform_0, window_bounds = array<i64: 8, 32>}, {transform_indices = @transform_1, window_bounds = array<i64: 8, 32>}, {pipeline_mode = #tpu.pipeline_mode<synchronous>, transform_indices = @transform_2, window_bounds = array<i64: 8, 1>}, {transform_indices = @transform_3, window_bounds = array<i64: 1, 1>}, {transform_indices = @transform_4, window_bounds = array<i64: 1, 1>}]} {
    %c1_i32 = arith.constant 1 : i32
    %0 = arith.muli %arg0, %c1_i32 : i32
    %1 = arith.addi %0, %arg1 : i32
    %2 = tpu.iota {dimensions = array<i32: 0>} : vector<8x1xi32>
    %c8_i32 = arith.constant 8 : i32
    %3 = arith.muli %1, %c8_i32 : i32
    %4 = vector.broadcast %3 : i32 to vector<8x1xi32>
    %5 = arith.addi %2, %4 : vector<8x1xi32>
    %c8_i32_0 = arith.constant 8 : i32
    %6 = vector.broadcast %c8_i32_0 : i32 to vector<8x1xi32>
    %7 = arith.cmpi slt, %5, %6 : vector<8x1xi32>
    %c0 = arith.constant 0 : index
    %c0_1 = arith.constant 0 : index
    %8 = vector.load %arg2[%c0, %c0_1] : memref<8x32xf32, #tpu.memory_space<vmem>>, vector<8x32xf32>
    %c0_2 = arith.constant 0 : index
    %c0_3 = arith.constant 0 : index
    %9 = vector.load %arg3[%c0_2, %c0_3] : memref<8x32xf32, #tpu.memory_space<vmem>>, vector<8x32xf32>
    %10 = arith.subf %8, %9 : vector<8x32xf32>
    %cst = arith.constant 9.99999997E-7 : f32
    %11 = vector.broadcast %cst : f32 to vector<8x32xf32>
    %12 = arith.addf %10, %11 : vector<8x32xf32>
    %13 = arith.mulf %12, %12 : vector<8x32xf32>
    %cst_4 = arith.constant dense<0.000000e+00> : vector<8xf32>
    %14 = vector.multi_reduction <add>, %13, %cst_4 [1] : vector<8x32xf32> to vector<8xf32>
    %15 = vector.shape_cast %14 : vector<8xf32> to vector<8x1xf32>
    %16 = math.sqrt %15 : vector<8x1xf32>
    %c0_5 = arith.constant 0 : index
    %c0_6 = arith.constant 0 : index
    %17 = vector.load %arg4[%c0_5, %c0_6] : memref<8x1xf32, #tpu.memory_space<vmem>>, vector<8x1xf32>
    %cst_7 = arith.constant 1.000000e+00 : f32
    %18 = vector.broadcast %cst_7 : f32 to vector<8x1xf32>
    %19 = arith.subf %18, %16 : vector<8x1xf32>
    %cst_8 = arith.constant 0.000000e+00 : f32
    %20 = vector.broadcast %cst_8 : f32 to vector<8x1xf32>
    %21 = arith.maximumf %19, %20 : vector<8x1xf32>
    %cst_9 = arith.constant 1.000000e+00 : f32
    %22 = vector.broadcast %cst_9 : f32 to vector<8x1xf32>
    %23 = arith.subf %22, %17 : vector<8x1xf32>
    %24 = arith.mulf %23, %15 : vector<8x1xf32>
    %25 = arith.mulf %21, %21 : vector<8x1xf32>
    %26 = arith.mulf %17, %25 : vector<8x1xf32>
    %27 = arith.addf %24, %26 : vector<8x1xf32>
    %cst_10 = arith.constant 5.000000e-01 : f32
    %28 = vector.broadcast %cst_10 : f32 to vector<8x1xf32>
    %29 = arith.cmpf olt, %16, %28 : vector<8x1xf32>
    %cst_11 = arith.constant 0.000000e+00 : f32
    %30 = vector.broadcast %cst_11 : f32 to vector<8x1xf32>
    %31 = arith.cmpf oeq, %17, %30 : vector<8x1xf32>
    %32 = arith.xori %29, %31 : vector<8x1xi1>
    %cst_12 = arith.constant dense<true> : vector<8x1xi1>
    %33 = arith.xori %32, %cst_12 : vector<8x1xi1>
    %34 = arith.extui %33 : vector<8x1xi1> to vector<8x1xi32>
    %35 = arith.sitofp %34 : vector<8x1xi32> to vector<8x1xf32>
    %cst_13 = arith.constant 0.000000e+00 : f32
    %36 = vector.broadcast %cst_13 : f32 to vector<8x1xf32>
    %37 = arith.select %7, %27, %36 : vector<8x1xi1>, vector<8x1xf32>
    %cst_14 = arith.constant 0.000000e+00 : f32
    %38 = vector.broadcast %cst_14 : f32 to vector<8x1xf32>
    %39 = arith.select %7, %35, %38 : vector<8x1xi1>, vector<8x1xf32>
    %c0_i32 = arith.constant 0 : i32
    %40 = arith.cmpi eq, %arg1, %c0_i32 : i32
    %41 = arith.extui %40 : i1 to i32
    %c0_i32_15 = arith.constant 0 : i32
    %42 = arith.cmpi ne, %41, %c0_i32_15 : i32
    scf.if %42 {
      %cst_26 = arith.constant 0.000000e+00 : f32
      %52 = vector.broadcast %cst_26 : f32 to vector<8x1xf32>
      %c0_27 = arith.constant 0 : index
      %c0_28 = arith.constant 0 : index
      %53 = vector.load %arg7[%c0_27, %c0_28] : memref<8x1xf32, #tpu.memory_space<vmem>>, vector<8x1xf32>
      tpu.vector_store %arg7[%c0_27, %c0_28], %52 {strides = array<i32>} : memref<8x1xf32, #tpu.memory_space<vmem>>, vector<8x1xf32>,
      %cst_29 = arith.constant 0.000000e+00 : f32
      %54 = vector.broadcast %cst_29 : f32 to vector<8x1xf32>
      %c0_30 = arith.constant 0 : index
      %c0_31 = arith.constant 0 : index
      %55 = vector.load %arg8[%c0_30, %c0_31] : memref<8x1xf32, #tpu.memory_space<vmem>>, vector<8x1xf32>
      tpu.vector_store %arg8[%c0_30, %c0_31], %54 {strides = array<i32>} : memref<8x1xf32, #tpu.memory_space<vmem>>, vector<8x1xf32>,
    } else {
    }
    %c0_16 = arith.constant 0 : index
    %c0_17 = arith.constant 0 : index
    %43 = vector.load %arg7[%c0_16, %c0_17] : memref<8x1xf32, #tpu.memory_space<vmem>>, vector<8x1xf32>
    %44 = arith.addf %43, %37 : vector<8x1xf32>
    %c0_18 = arith.constant 0 : index
    %c0_19 = arith.constant 0 : index
    %45 = vector.load %arg7[%c0_18, %c0_19] : memref<8x1xf32, #tpu.memory_space<vmem>>, vector<8x1xf32>
    tpu.vector_store %arg7[%c0_18, %c0_19], %44 {strides = array<i32>} : memref<8x1xf32, #tpu.memory_space<vmem>>, vector<8x1xf32>,
    %c0_20 = arith.constant 0 : index
    %c0_21 = arith.constant 0 : index
    %46 = vector.load %arg8[%c0_20, %c0_21] : memref<8x1xf32, #tpu.memory_space<vmem>>, vector<8x1xf32>
    %47 = arith.addf %46, %39 : vector<8x1xf32>
    %c0_22 = arith.constant 0 : index
    %c0_23 = arith.constant 0 : index
    %48 = vector.load %arg8[%c0_22, %c0_23] : memref<8x1xf32, #tpu.memory_space<vmem>>, vector<8x1xf32>
    tpu.vector_store %arg8[%c0_22, %c0_23], %47 {strides = array<i32>} : memref<8x1xf32, #tpu.memory_space<vmem>>, vector<8x1xf32>,
    %c0_i32_24 = arith.constant 0 : i32
    %49 = arith.cmpi eq, %arg1, %c0_i32_24 : i32
    %50 = arith.extui %49 : i1 to i32
    %c0_i32_25 = arith.constant 0 : i32
    %51 = arith.cmpi ne, %50, %c0_i32_25 : i32
    scf.if %51 {
      %c0_26 = arith.constant 0 : index
      %c0_27 = arith.constant 0 : index
      %52 = vector.load %arg7[%c0_26, %c0_27] : memref<8x1xf32, #tpu.memory_space<vmem>>, vector<8x1xf32>
      %53 = vector.shape_cast %52 : vector<8x1xf32> to vector<1x8x1xf32>
      %cst_28 = arith.constant dense<0.000000e+00> : vector<1xf32>
      %54 = vector.multi_reduction <add>, %53, %cst_28 [1, 2] : vector<1x8x1xf32> to vector<1xf32>
      %55 = vector.shape_cast %54 : vector<1xf32> to vector<1x1x1xf32>
      %56 = vector.extract %55[0, 0, 0] : f32 from vector<1x1x1xf32>
      %c0_29 = arith.constant 0 : index
      %c0_30 = arith.constant 0 : index
      %57 = memref.load %arg5[%c0_29, %c0_30] : memref<1x1xf32, #tpu.memory_space<smem>>
      memref.store %56, %arg5[%c0_29, %c0_30] : memref<1x1xf32, #tpu.memory_space<smem>>
      %c0_31 = arith.constant 0 : index
      %c0_32 = arith.constant 0 : index
      %58 = vector.load %arg8[%c0_31, %c0_32] : memref<8x1xf32, #tpu.memory_space<vmem>>, vector<8x1xf32>
      %59 = vector.shape_cast %58 : vector<8x1xf32> to vector<1x8x1xf32>
      %cst_33 = arith.constant dense<0.000000e+00> : vector<1xf32>
      %60 = vector.multi_reduction <add>, %59, %cst_33 [1, 2] : vector<1x8x1xf32> to vector<1xf32>
      %61 = vector.shape_cast %60 : vector<1xf32> to vector<1x1x1xf32>
      %62 = vector.extract %61[0, 0, 0] : f32 from vector<1x1x1xf32>
      %c0_34 = arith.constant 0 : index
      %c0_35 = arith.constant 0 : index
      %63 = memref.load %arg6[%c0_34, %c0_35] : memref<1x1xf32, #tpu.memory_space<smem>>
      memref.store %62, %arg6[%c0_34, %c0_35] : memref<1x1xf32, #tpu.memory_space<smem>>
    } else {
    }
    return
  }
  func.func @transform_0(%arg0: i32, %arg1: i32) -> (i32, i32) {
    %c1_i32 = arith.constant 1 : i32
    %0 = arith.muli %arg0, %c1_i32 : i32
    %1 = arith.addi %0, %arg1 : i32
    %c0_i32 = arith.constant 0 : i32
    %2 = arith.minsi %1, %c0_i32 : i32
    %c0_i32_0 = arith.constant 0 : i32
    %c0_i32_1 = arith.constant 0 : i32
    return %2, %c0_i32_0 : i32, i32
  }
  func.func @transform_1(%arg0: i32, %arg1: i32) -> (i32, i32) {
    %c1_i32 = arith.constant 1 : i32
    %0 = arith.muli %arg0, %c1_i32 : i32
    %1 = arith.addi %0, %arg1 : i32
    %c0_i32 = arith.constant 0 : i32
    %2 = arith.minsi %1, %c0_i32 : i32
    %c0_i32_0 = arith.constant 0 : i32
    %c0_i32_1 = arith.constant 0 : i32
    return %2, %c0_i32_0 : i32, i32
  }
  func.func @transform_2(%arg0: i32, %arg1: i32) -> (i32, i32) {
    %c0_i32 = arith.constant 0 : i32
    %c0_i32_0 = arith.constant 0 : i32
    %c0_i32_1 = arith.constant 0 : i32
    return %c0_i32, %c0_i32_0 : i32, i32
  }
  func.func @transform_3(%arg0: i32, %arg1: i32) -> (i32, i32) {
    %c0_i32 = arith.constant 0 : i32
    %c0_i32_0 = arith.constant 0 : i32
    return %arg0, %c0_i32 : i32, i32
  }
  func.func @transform_4(%arg0: i32, %arg1: i32) -> (i32, i32) {
    %c0_i32 = arith.constant 0 : i32
    %c0_i32_0 = arith.constant 0 : i32
    return %arg0, %c0_i32 : i32, i32
  }
}

</mosaic_0001>

<llo_original>
// kernel: tpu_custom_call.1
$region0: #{tpu_custom_call.1}
  #allocation0 [shape = 'u32[]', space=smem, size = 0x4, offset = 0x4, fixed_abs, tag = 'smem constant byte address 0x4 - core index']
  #allocation1 [shape = 'u32[144,128]{1,0:T(1,128)}', space=vmem, size = 0x12000, scoped, tag = 'internal scratch']
  #allocation2 [shape = 'f32[8,1]{1,0:T(8,128)}', space=vmem, size = 0x1000, scoped, tag = 'scratch operand']
  #allocation3 [shape = 'f32[8,1]{1,0:T(8,128)}', space=vmem, size = 0x1000, scoped, tag = 'scratch operand']
  %s0 = inlined_call_operand.vmem [shape: f32[8,32], index: 0, kind: input, shape index: {}]
  %s1 = inlined_call_operand.hbm [shape: f32[8,32], index: 1, kind: input, shape index: {}]
  %s2 = inlined_call_operand.vmem [shape: f32[8,1], index: 2, kind: input, shape index: {}]
  %s3 = inlined_call_operand.hbm [shape: f32[1,1], index: 3, kind: output, shape index: {0}]
  %s4 = inlined_call_operand.hbm [shape: f32[1,1], index: 4, kind: output, shape index: {1}]
  %5 = xla_tuple %s3, %s4
  %s6 = sld [smem:[#allocation0]]
  $region42: #{tpu_custom_call.1} parent=0
    _
  %s8 = ssub.s32 1, %s6
  %s9 = scalar_select 0, %s8, %s6
  $region1: #{tpu_custom_call.1} parent=0
    #allocation4 [shape = 'u8[4096]{0}', space=vmem, size = 0x1000, scoped, tag = 'input window, operand 1, single buffered']
    #allocation5 [shape = 's32[1]{0}', space=sflag, size = 0x4, scoped, tag = 'scoped memory for tpu_custom_call.1']
    #allocation6 [shape = 's32[1]{0}', space=sflag, size = 0x4, scoped, tag = 'scoped memory for tpu_custom_call.1']
    #allocation7 [shape = 'u8[512]{0}', space=smem, size = 0x200, scoped, tag = 'output window, operand 0, single buffered']
    #allocation8 [shape = 'u8[512]{0}', space=smem, size = 0x200, scoped, tag = 'output window, operand 1, single buffered']
    #allocation9 [shape = 's32[1]{0}', space=sflag, size = 0x4, scoped, tag = 'scoped memory for tpu_custom_call.1']
    %10 = vsyncpa [#allocation5], 0
    %11 = vsyncpa [#allocation6], 0
    %12 = vsyncpa [#allocation9], 0
    // Predicated region
    $region2: #{tpu_custom_call.1} parent=1 // pred_check
      _
    $region3: #{tpu_custom_call.1} parent=1 // pred_check_branch
      %14 = sbr.rel (0) target = $region5
    $region4: #{tpu_custom_call.1} parent=1 // pred_region
      %s15 = sadd.s32 0, 0
      %p16 = scmp.lt.s32.totalorder %s15, 0
      %s17 = scalar_select %p16, %s15, 0
      %p18 = scmp.lt.s32.totalorder %s17, 0
      %s19 = scalar_select %p18, %s17, 0
      %s20 = smul.addr %s19, 8
      %s21 = scalar_lea.vmem %s0, %s20
      %s22 = sadd.s32 0, 0
      %p23 = scmp.lt.s32.totalorder %s22, 0
      %s24 = scalar_select %p23, %s22, 0
    $region5: #{tpu_custom_call.1} parent=1 // pred_fallthru
      _
    // Predicated region
    $region6: #{tpu_custom_call.1} parent=1 // pred_check
      _
    $region7: #{tpu_custom_call.1} parent=1 // pred_check_branch
      %26 = sbr.rel (0) target = $region9
    $region8: #{tpu_custom_call.1} parent=1 // pred_region
      %s27 = sadd.s32 0, 0
      %p28 = scmp.lt.s32.totalorder %s27, 0
      %s29 = scalar_select %p28, %s27, 0
      %s31 = ssub.s32 128, 128
      %32 = vsyncadd [#allocation5], %s31
      %s33 = smul.addr %s29, 128
      %s34 = scalar_lea.hbm %s1, %s33
      %s36 = sshll.u32 [#allocation4], 4
      %s37 = int_to_ptr.vmem [resolvable:$true] %s36
      %39 = dma.hbm_to_vmem [thread:$0]  %s34, 128, %s37, [#allocation5]
    $region9: #{tpu_custom_call.1} parent=1 // pred_fallthru
      _
    // Predicated region
    $region10: #{tpu_custom_call.1} parent=1 // pred_check
      _
    $region11: #{tpu_custom_call.1} parent=1 // pred_check_branch
      %41 = sbr.rel (0) target = $region13
    $region12: #{tpu_custom_call.1} parent=1 // pred_region
      _
    $region13: #{tpu_custom_call.1} parent=1 // pred_fallthru
      _
    // Predicated region
    $region14: #{tpu_custom_call.1} parent=1 // pred_check
      _
    $region15: #{tpu_custom_call.1} parent=1 // pred_check_branch
      %43 = sbr.rel (0) target = $region17
    $region16: #{tpu_custom_call.1} parent=1 // pred_region
      %44 = dma.done [#allocation5], 128
    $region17: #{tpu_custom_call.1} parent=1 // pred_fallthru
      _
    %s45 = sadd.s32 0, 0
    %p46 = scmp.lt.s32.totalorder %s45, 0
    %s47 = scalar_select %p46, %s45, 0
    %p48 = scmp.lt.s32.totalorder %s47, 0
    %s49 = scalar_select %p48, %s47, 0
    %s50 = smul.addr %s49, 8
    %s51 = scalar_lea.vmem %s0, %s50
    %s52 = sadd.s32 0, 0
    %p53 = scmp.lt.s32.totalorder %s52, 0
    %s54 = scalar_select %p53, %s52, 0
    %p55 = scmp.lt.s32.totalorder %s54, 0
    %s56 = scalar_select %p55, %s54, 0
    %s57 = smul.addr %s56, 8
    %s58 = scalar_lea.vmem %s0, %s57
    %s59 = sadd.s32 0, 0
    %p60 = scmp.lt.s32.totalorder %s59, 0
    %s61 = scalar_select %p60, %s59, 0
    %s62 = sadd.s32 0, 0
    %p63 = scmp.lt.s32.totalorder %s62, 0
    %s64 = scalar_select %p63, %s62, 0
    %s65 = sadd.s32 0, 0
    %v66 = vlaneseq
    %v67 = vshrl.u32 %v66, 7
    %s68 = smul.u32 %s65, 8
    %v69 = vstv %s68
    %v70 = vadd.s32 %v67, %v69
    %vm71 = vcmp.lt.s32.totalorder %v70, 8
    %v72 = vld [vmem:[%s58] sm:$0xff]
    %v73 = vld [vmem:[#allocation4] sm:$0xff]
    %v74 = vsub.f32 %v72, %v73
    %v75 = vadd.f32 %v74, 1e-06
    %v76 = vmul.f32 %v75, %v75
    %vm77 = vcmask 261120
    %v78 = vsel %vm77, %v76, 0.0
    %79 = vadd.xlane.f32.xlu0 %v78
    %v80 = vpop.xlane.xlu0 %79
    %v81 = vrsqrt.pop %v80
    %v82 = vmul.f32 %v80, %v81
    %vm83 = vcmp.eq.f32.partialorder %v80, inf
    %v84 = vsel %vm83, %v80, %v82
    %vm85 = vcmp.eq.f32.partialorder %v80, 0.0
    %v86 = vand.u32 %v80, 2147483648
    %v87 = vsel %vm85, %v86, %v84
    %v88 = vld [vmem:[%s2] sm:$0xff]
    %v89 = vsub.f32 1.0, %v87
    %v90 = vmax.f32 %v89, 0.0
    %v91 = vsub.f32 1.0, %v88
    %v92 = vmul.f32 %v91, %v80
    %v93 = vmul.f32 %v90, %v90
    %v94 = vmul.f32 %v88, %v93
    %v95 = vadd.f32 %v92, %v94
    %vm96 = vcmp.lt.f32.partialorder %v87, 0.5
    %vm97 = vcmp.eq.f32.partialorder %v88, 0.0
    %vm98 = vmxor %vm96, %vm97
    %vm99 = vmxor %vm98, 1
    %v100 = vsel %vm99, 1, 0
    %v101 = vcvt.s32.f32 %v100
    %v102 = vsel %vm71, %v95, 0.0
    %v103 = vsel %vm71, %v101, 0.0
    %p104 = scmp.eq.s32.totalorder 0, 0
    // Predicated region
    $region18: #{tpu_custom_call.1} parent=1 // pred_check
      %p105 = pneg %p104
    $region19: #{tpu_custom_call.1} parent=1 // pred_check_branch
      %107 = sbr.rel (%p105) target = $region21
    $region20: #{tpu_custom_call.1} parent=1 // pred_region
      %vm108 = vcmask 7168
      %109 = vst.msk [vmem:[#allocation2] sm:$0xff] %vm108, 0.0
      %110 = vst.msk [vmem:[#allocation3] sm:$0xff] %vm108, 0.0
    $region21: #{tpu_custom_call.1} parent=1 // pred_fallthru
      _
    %v111 = vld [vmem:[#allocation2] sm:$0xff]
    %v112 = vadd.f32 %v111, %v102
    %vm113 = vcmask 7168
    %114 = vst.msk [vmem:[#allocation2] sm:$0xff] %vm113, %v112
    %v115 = vld [vmem:[#allocation3] sm:$0xff]
    %v116 = vadd.f32 %v115, %v103
    %117 = vst.msk [vmem:[#allocation3] sm:$0xff] %vm113, %v116
    // Predicated region
    $region22: #{tpu_custom_call.1} parent=1 // pred_check
      %p118 = pneg %p104
    $region23: #{tpu_custom_call.1} parent=1 // pred_check_branch
      %120 = sbr.rel (%p118) target = $region25
    $region24: #{tpu_custom_call.1} parent=1 // pred_region
      %v121 = vld [vmem:[#allocation2] sm:$0xff]
      %v122 = vsel %vm113, %v121, 0.0
      %123 = vadd.xlane.f32.xlu0 %v122
      %v124 = vpop.xlane.xlu0 %123
      %v125 = vrot.slane %v124, 4
      %v126 = vadd.f32 %v124, %v125
      %v127 = vrot.slane %v126, 2
      %v128 = vadd.f32 %v126, %v127
      %v129 = vrot.slane %v128, 1
      %v130 = vadd.f32 %v128, %v129
      %s131 = vtos %v130
      %s132 = scalar_lea.smem [#allocation7], 0
      %133 = sst [smem:[%s132]] %s131
      %v134 = vld [vmem:[#allocation3] sm:$0xff]
      %v135 = vsel %vm113, %v134, 0.0
      %136 = vadd.xlane.f32.xlu0 %v135
      %v137 = vpop.xlane.xlu0 %136
      %v138 = vrot.slane %v137, 4
      %v139 = vadd.f32 %v137, %v138
      %v140 = vrot.slane %v139, 2
      %v141 = vadd.f32 %v139, %v140
      %v142 = vrot.slane %v141, 1
      %v143 = vadd.f32 %v141, %v142
      %s144 = vtos %v143
      %s145 = scalar_lea.smem [#allocation8], 0
      %146 = sst [smem:[%s145]] %s144
    $region25: #{tpu_custom_call.1} parent=1 // pred_fallthru
      _
    // Predicated region
    $region26: #{tpu_custom_call.1} parent=1 // pred_check
      _
    $region27: #{tpu_custom_call.1} parent=1 // pred_check_branch
      %148 = sbr.rel (0) target = $region29
    $region28: #{tpu_custom_call.1} parent=1 // pred_region
      %s150 = ssub.s32 16, 16
      %151 = vsyncadd [#allocation6], %s150
      %154 = dma.smem_to_hbm [#allocation7], 16, %s3, [#allocation6]
    $region29: #{tpu_custom_call.1} parent=1 // pred_fallthru
      _
    // Predicated region
    $region30: #{tpu_custom_call.1} parent=1 // pred_check
      _
    $region31: #{tpu_custom_call.1} parent=1 // pred_check_branch
      %156 = sbr.rel (0) target = $region33
    $region32: #{tpu_custom_call.1} parent=1 // pred_region
      %s158 = ssub.s32 16, 16
      %159 = vsyncadd [#allocation9], %s158
      %162 = dma.smem_to_hbm [#allocation8], 16, %s4, [#allocation9]
    $region33: #{tpu_custom_call.1} parent=1 // pred_fallthru
      _
    // Predicated region
    $region34: #{tpu_custom_call.1} parent=1 // pred_check
      _
    $region35: #{tpu_custom_call.1} parent=1 // pred_check_branch
      %164 = sbr.rel (0) target = $region37
    $region36: #{tpu_custom_call.1} parent=1 // pred_region
      %165 = dma.done [#allocation6], 16
    $region37: #{tpu_custom_call.1} parent=1 // pred_fallthru
      _
    // Predicated region
    $region38: #{tpu_custom_call.1} parent=1 // pred_check
      _
    $region39: #{tpu_custom_call.1} parent=1 // pred_check_branch
      %167 = sbr.rel (0) target = $region41
    $region40: #{tpu_custom_call.1} parent=1 // pred_region
      %168 = dma.done [#allocation9], 16
    $region41: #{tpu_custom_call.1} parent=1 // pred_fallthru
      _
    %169 = sfence
    %170 = vsyncpa [#allocation5], 1
    %171 = vsyncpa [#allocation6], 1
    %172 = vsyncpa [#allocation9], 1

</llo_original>
